<compile_context>
chip_gen: v7x
topology: tpu7x:2x2x1
jax: 0.10.0
libtpu: 0.0.40
codegen_flags: <defaults>
</compile_context>

<pallas_src>
import functools

import jax
import jax.numpy as jnp
from jax.experimental import pallas as pl
from jax.experimental.pallas import tpu as pltpu

LN_EPS = 1e-5
NEG_SLOPE = 0.2


def _layer_norm(h, gamma, beta):
    # LayerNorm over the last dim, biased variance, eps=1e-5 (PyTorch default).
    mean = jnp.mean(h, axis=-1, keepdims=True)
    centered = h - mean
    var = jnp.mean(centered * centered, axis=-1, keepdims=True)
    inv = jax.lax.rsqrt(var + LN_EPS)
    return centered * inv * gamma + beta


def _leaky_relu(h):
    # For slope in (0,1): max(h, a*h) == where(h > 0, h, a*h).
    return jnp.maximum(h, NEG_SLOPE * h)


def residual_block_kernel(x_ref, w1_ref, w2_ref, vec_ref, o_ref):
    # x tile: (TM, D). Weights are bf16; MXU accumulates in f32; LN/activation math is f32.
    x = x_ref[...]
    x_f32 = x.astype(jnp.float32)
    vecs = vec_ref[...].astype(jnp.float32)            # (8, D): b1,g1,be1,b2,g2,be2,pad,pad
    b1, g1, be1 = vecs[0:1], vecs[1:2], vecs[2:3]
    b2, g2, be2 = vecs[3:4], vecs[4:5], vecs[5:6]

    # Linear 1 (MXU, bf16 operands, f32 accumulation) + LayerNorm 1 + LeakyReLU(0.2)
    h = jnp.dot(x.astype(w1_ref.dtype), w1_ref[...],
                preferred_element_type=jnp.float32) + b1
    h = _layer_norm(h, g1, be1)
    h = _leaky_relu(h)
    # Linear 2 + LayerNorm 2
    h = jnp.dot(h.astype(w2_ref.dtype), w2_ref[...],
                preferred_element_type=jnp.float32) + b2
    h = _layer_norm(h, g2, be2)
    # Residual add + outer LeakyReLU(0.2)
    o_ref[...] = _leaky_relu(h + x_f32).astype(o_ref.dtype)


def prepare_params(params, weight_dtype=jnp.bfloat16):
    """One-time host-side prep: transpose Linear weights (out,in)->(in,out), cast to bf16
    for the MXU, and pack the six per-feature f32 vectors into one (8, D) sublane slab
    (rows: b1, g1, be1, b2, g2, be2, pad, pad)."""
    D = jnp.asarray(params["w1"]).shape[0]
    zero = jnp.zeros((D,), jnp.float32)
    vecs = jnp.stack(
        [jnp.asarray(params["b1"], jnp.float32), jnp.asarray(params["g1"], jnp.float32),
         jnp.asarray(params["be1"], jnp.float32), jnp.asarray(params["b2"], jnp.float32),
         jnp.asarray(params["g2"], jnp.float32), jnp.asarray(params["be2"], jnp.float32),
         zero, zero],
        axis=0,
    )  # (8, D) f32
    return {
        "w1": jnp.asarray(params["w1"]).T.astype(weight_dtype),
        "w2": jnp.asarray(params["w2"]).T.astype(weight_dtype),
        "vecs": vecs,
    }


def _resident_spec(shape):
    """Constant-index block kept VMEM-resident; pin to a single pipeline buffer."""
    index_map = lambda i: (0,) * len(shape)
    try:
        return pl.BlockSpec(shape, index_map, pipeline_mode=pl.Buffered(1))
    except Exception:  # older jax without pipeline_mode / Buffered(1) support
        return pl.BlockSpec(shape, index_map)


def _choose_tm(n_rows, tm):
    """Row tile: multiple of 8, large (amortize ~0.35us/step), but >=2 balanced tiles
    so megacore (v7x) can split the row grid."""
    t = max(8, (min(tm, n_rows) // 8) * 8)
    if n_rows >= 16 and pl.cdiv(n_rows, t) < 2:
        t = max(8, ((((n_rows + 1) // 2) + 7) // 8) * 8)
    return t


def _vmem_limit_bytes(budget):
    try:
        cap = pltpu.get_tpu_info().vmem_capacity_bytes
    except Exception:
        cap = 128 * 1024 * 1024
    # ~80% of physical VMEM leaves headroom for Mosaic scratch/semaphores (64 MiB on v7x,
    # 128 MiB on v5e/v6e).
    return int(min(max(32 * 1024 * 1024, budget), 0.8 * cap))


@functools.partial(jax.jit, static_argnames=("tm",))
def residual_block(x, prepared, *, tm=1024):
    """x: (N, D). prepared: output of prepare_params()."""
    N, D = x.shape
    w1, w2, vecs = prepared["w1"], prepared["w2"], prepared["vecs"]

    TM = _choose_tm(N, tm)
    grid = (pl.cdiv(N, TM),)

    x_spec = pl.BlockSpec((TM, D), lambda i: (i, 0))   # pipelined over row tiles
    w_spec = _resident_spec((D, D))                    # bf16 weights, single buffer
    v_spec = _resident_spec((8, D))                    # packed bias/scale slab

    # VMEM budget (generous): resident weights + slab + double-buffered in/out row tiles.
    bytes_resident = 2 * D * D * w1.dtype.itemsize + vecs.size * vecs.dtype.itemsize
    bytes_tiles = 4 * TM * D * x.dtype.itemsize
    vmem_limit = _vmem_limit_bytes(int(1.5 * (bytes_resident + bytes_tiles)) + (4 << 20))

    cost = pl.CostEstimate(
        flops=4 * N * D * D,                 # two N x D x D matmuls
        transcendentals=2 * N,               # two rsqrt per row (LayerNorms)
        bytes_accessed=2 * N * D * x.dtype.itemsize + bytes_resident,
    )

    return pl.pallas_call(
        residual_block_kernel,
        out_shape=jax.ShapeDtypeStruct((N, D), x.dtype),
        grid_spec=pltpu.PrefetchScalarGridSpec(
            num_scalar_prefetch=0,
            grid=grid,
            in_specs=[x_spec, w_spec, w_spec, v_spec],
            out_specs=x_spec,
        ),
        compiler_params=pltpu.CompilerParams(
            dimension_semantics=("parallel",),   # independent row tiles -> megacore on v7x
            vmem_limit_bytes=vmem_limit,
        ),
        cost_estimate=cost,
    )(x, w1, w2, vecs)


def _reference(x, params):
    # Pure-JAX f32 reference mirroring the PyTorch forward.
    def ln(h, g, b):
        m = jnp.mean(h, axis=-1, keepdims=True)
        v = jnp.mean((h - m) ** 2, axis=-1, keepdims=True)
        return (h - m) / jnp.sqrt(v + LN_EPS) * g + b

    def lrelu(h):
        return jnp.where(h > 0, h, NEG_SLOPE * h)

    hp = jax.lax.Precision.HIGHEST
    h = jnp.dot(x, params["w1"].T, precision=hp) + params["b1"]
    h = ln(h, params["g1"], params["be1"])
    h = lrelu(h)
    h = jnp.dot(h, params["w2"].T, precision=hp) + params["b2"]
    h = ln(h, params["g2"], params["be2"])
    return lrelu(h + x)


if __name__ == "__main__":
    # Small but lane-dense demo shapes: D a multiple of 128; N=256 gives two balanced
    # 128-row tiles (exercises the pipelined, megacore-parallel row grid).
    N, D = 256, 128
    key = jax.random.PRNGKey(0)
    kx, k1, k2, k3, k4 = jax.random.split(key, 5)

    x = jax.random.normal(kx, (N, D), dtype=jnp.float32)

    bound = 1.0 / jnp.sqrt(D)
    params = {
        "w1": jax.random.uniform(k1, (D, D), minval=-bound, maxval=bound, dtype=jnp.float32),
        "b1": jax.random.uniform(k2, (D,), minval=-bound, maxval=bound, dtype=jnp.float32),
        "g1": jnp.ones((D,), jnp.float32),
        "be1": jnp.zeros((D,), jnp.float32),
        "w2": jax.random.uniform(k3, (D, D), minval=-bound, maxval=bound, dtype=jnp.float32),
        "b2": jax.random.uniform(k4, (D,), minval=-bound, maxval=bound, dtype=jnp.float32),
        "g2": jnp.ones((D,), jnp.float32),
        "be2": jnp.zeros((D,), jnp.float32),
    }

    prepared = prepare_params(params)            # one-time transpose / bf16 cast / packing
    out = residual_block(x, prepared)
    out = jax.block_until_ready(out)

    ref = _reference(x, params)
    assert out.shape == (N, D)
    # bf16 MXU operands vs. f32 HIGHEST reference -> relaxed tolerance.
    assert jnp.allclose(out, ref, atol=3e-2, rtol=3e-2), "mismatch vs reference"
    print("KERNEL_OK")
</pallas_src>

<mosaic_0001>
module attributes {stable_mosaic.version = 11 : i64} {
  func.func @residual_block_kernel(%arg0: i32, %arg1: memref<128x128xf32, #tpu.memory_space<vmem>>, %arg2: memref<128x128xbf16, #tpu.memory_space<vmem>>, %arg3: memref<128x128xbf16, #tpu.memory_space<vmem>>, %arg4: memref<8x128xf32, #tpu.memory_space<vmem>>, %arg5: memref<128x128xf32, #tpu.memory_space<vmem>>) attributes {dimension_semantics = [#tpu.dimension_semantics<parallel>], iteration_bounds = array<i64: 2>, scalar_prefetch = 0 : i64, scratch_operands = 0 : i64, tpu.core_type = #tpu.core_type<tc>, window_params = [{transform_indices = @transform_0, window_bounds = array<i64: 128, 128>}, {pipeline_mode = #tpu.pipeline_mode<synchronous>, transform_indices = @transform_1, window_bounds = array<i64: 128, 128>}, {pipeline_mode = #tpu.pipeline_mode<synchronous>, transform_indices = @transform_2, window_bounds = array<i64: 128, 128>}, {pipeline_mode = #tpu.pipeline_mode<synchronous>, transform_indices = @transform_3, window_bounds = array<i64: 8, 128>}, {transform_indices = @transform_4, window_bounds = array<i64: 128, 128>}]} {
    %c0 = arith.constant 0 : index
    %c0_0 = arith.constant 0 : index
    %0 = vector.load %arg1[%c0, %c0_0] : memref<128x128xf32, #tpu.memory_space<vmem>>, vector<128x128xf32>
    %c0_1 = arith.constant 0 : index
    %c0_2 = arith.constant 0 : index
    %1 = vector.load %arg4[%c0_1, %c0_2] : memref<8x128xf32, #tpu.memory_space<vmem>>, vector<8x128xf32>
    %2 = vector.extract_strided_slice %1 {offsets = [0, 0], sizes = [1, 128], strides = [1, 1]} : vector<8x128xf32> to vector<1x128xf32>
    %3 = vector.extract_strided_slice %1 {offsets = [1, 0], sizes = [1, 128], strides = [1, 1]} : vector<8x128xf32> to vector<1x128xf32>
    %4 = vector.extract_strided_slice %1 {offsets = [2, 0], sizes = [1, 128], strides = [1, 1]} : vector<8x128xf32> to vector<1x128xf32>
    %5 = vector.extract_strided_slice %1 {offsets = [3, 0], sizes = [1, 128], strides = [1, 1]} : vector<8x128xf32> to vector<1x128xf32>
    %6 = vector.extract_strided_slice %1 {offsets = [4, 0], sizes = [1, 128], strides = [1, 1]} : vector<8x128xf32> to vector<1x128xf32>
    %7 = vector.extract_strided_slice %1 {offsets = [5, 0], sizes = [1, 128], strides = [1, 1]} : vector<8x128xf32> to vector<1x128xf32>
    %8 = arith.truncf %0 : vector<128x128xf32> to vector<128x128xbf16>
    %c0_3 = arith.constant 0 : index
    %c0_4 = arith.constant 0 : index
    %9 = vector.load %arg2[%c0_3, %c0_4] : memref<128x128xbf16, #tpu.memory_space<vmem>>, vector<128x128xbf16>
    %cst = arith.constant dense<0.000000e+00> : vector<128x128xf32>
    %10 = tpu.matmul %8, %9, %cst {dimension_numbers = #tpu.dot_dimension_numbers<[1], [0], [0], [1], [0, 0, 1, 1], [], []>} : vector<128x128xbf16>, vector<128x128xbf16>, vector<128x128xf32> -> vector<128x128xf32>
    %11 = vector.broadcast %2 : vector<1x128xf32> to vector<128x128xf32>
    %12 = arith.addf %10, %11 : vector<128x128xf32>
    %cst_5 = arith.constant dense<0.000000e+00> : vector<128xf32>
    %13 = vector.multi_reduction <add>, %12, %cst_5 [1] : vector<128x128xf32> to vector<128xf32>
    %14 = vector.shape_cast %13 : vector<128xf32> to vector<128x1xf32>
    %cst_6 = arith.constant 1.280000e+02 : f32
    %15 = vector.broadcast %cst_6 : f32 to vector<128x1xf32>
    %16 = arith.divf %14, %15 : vector<128x1xf32>
    %17 = vector.broadcast %16 : vector<128x1xf32> to vector<128x128xf32>
    %18 = arith.subf %12, %17 : vector<128x128xf32>
    %19 = arith.mulf %18, %18 : vector<128x128xf32>
    %cst_7 = arith.constant dense<0.000000e+00> : vector<128xf32>
    %20 = vector.multi_reduction <add>, %19, %cst_7 [1] : vector<128x128xf32> to vector<128xf32>
    %21 = vector.shape_cast %20 : vector<128xf32> to vector<128x1xf32>
    %cst_8 = arith.constant 1.280000e+02 : f32
    %22 = vector.broadcast %cst_8 : f32 to vector<128x1xf32>
    %23 = arith.divf %21, %22 : vector<128x1xf32>
    %cst_9 = arith.constant 9.99999974E-6 : f32
    %24 = vector.broadcast %cst_9 : f32 to vector<128x1xf32>
    %25 = arith.addf %23, %24 : vector<128x1xf32>
    %26 = math.rsqrt %25 : vector<128x1xf32>
    %27 = vector.broadcast %26 : vector<128x1xf32> to vector<128x128xf32>
    %28 = arith.mulf %18, %27 : vector<128x128xf32>
    %29 = vector.broadcast %3 : vector<1x128xf32> to vector<128x128xf32>
    %30 = arith.mulf %28, %29 : vector<128x128xf32>
    %31 = vector.broadcast %4 : vector<1x128xf32> to vector<128x128xf32>
    %32 = arith.addf %30, %31 : vector<128x128xf32>
    %cst_10 = arith.constant 2.000000e-01 : f32
    %33 = vector.broadcast %cst_10 : f32 to vector<128x128xf32>
    %34 = arith.mulf %33, %32 : vector<128x128xf32>
    %35 = arith.maximumf %32, %34 : vector<128x128xf32>
    %36 = arith.truncf %35 : vector<128x128xf32> to vector<128x128xbf16>
    %c0_11 = arith.constant 0 : index
    %c0_12 = arith.constant 0 : index
    %37 = vector.load %arg3[%c0_11, %c0_12] : memref<128x128xbf16, #tpu.memory_space<vmem>>, vector<128x128xbf16>
    %cst_13 = arith.constant dense<0.000000e+00> : vector<128x128xf32>
    %38 = tpu.matmul %36, %37, %cst_13 {dimension_numbers = #tpu.dot_dimension_numbers<[1], [0], [0], [1], [0, 0, 1, 1], [], []>} : vector<128x128xbf16>, vector<128x128xbf16>, vector<128x128xf32> -> vector<128x128xf32>
    %39 = vector.broadcast %5 : vector<1x128xf32> to vector<128x128xf32>
    %40 = arith.addf %38, %39 : vector<128x128xf32>
    %cst_14 = arith.constant dense<0.000000e+00> : vector<128xf32>
    %41 = vector.multi_reduction <add>, %40, %cst_14 [1] : vector<128x128xf32> to vector<128xf32>
    %42 = vector.shape_cast %41 : vector<128xf32> to vector<128x1xf32>
    %cst_15 = arith.constant 1.280000e+02 : f32
    %43 = vector.broadcast %cst_15 : f32 to vector<128x1xf32>
    %44 = arith.divf %42, %43 : vector<128x1xf32>
    %45 = vector.broadcast %44 : vector<128x1xf32> to vector<128x128xf32>
    %46 = arith.subf %40, %45 : vector<128x128xf32>
    %47 = arith.mulf %46, %46 : vector<128x128xf32>
    %cst_16 = arith.constant dense<0.000000e+00> : vector<128xf32>
    %48 = vector.multi_reduction <add>, %47, %cst_16 [1] : vector<128x128xf32> to vector<128xf32>
    %49 = vector.shape_cast %48 : vector<128xf32> to vector<128x1xf32>
    %cst_17 = arith.constant 1.280000e+02 : f32
    %50 = vector.broadcast %cst_17 : f32 to vector<128x1xf32>
    %51 = arith.divf %49, %50 : vector<128x1xf32>
    %cst_18 = arith.constant 9.99999974E-6 : f32
    %52 = vector.broadcast %cst_18 : f32 to vector<128x1xf32>
    %53 = arith.addf %51, %52 : vector<128x1xf32>
    %54 = math.rsqrt %53 : vector<128x1xf32>
    %55 = vector.broadcast %54 : vector<128x1xf32> to vector<128x128xf32>
    %56 = arith.mulf %46, %55 : vector<128x128xf32>
    %57 = vector.broadcast %6 : vector<1x128xf32> to vector<128x128xf32>
    %58 = arith.mulf %56, %57 : vector<128x128xf32>
    %59 = vector.broadcast %7 : vector<1x128xf32> to vector<128x128xf32>
    %60 = arith.addf %58, %59 : vector<128x128xf32>
    %61 = arith.addf %60, %0 : vector<128x128xf32>
    %cst_19 = arith.constant 2.000000e-01 : f32
    %62 = vector.broadcast %cst_19 : f32 to vector<128x128xf32>
    %63 = arith.mulf %62, %61 : vector<128x128xf32>
    %64 = arith.maximumf %61, %63 : vector<128x128xf32>
    %c0_20 = arith.constant 0 : index
    %c0_21 = arith.constant 0 : index
    %65 = vector.load %arg5[%c0_20, %c0_21] : memref<128x128xf32, #tpu.memory_space<vmem>>, vector<128x128xf32>
    tpu.vector_store %arg5[%c0_20, %c0_21], %64 {strides = array<i32>} : memref<128x128xf32, #tpu.memory_space<vmem>>, vector<128x128xf32>,
    return
  }
  func.func @transform_0(%arg0: i32) -> (i32, i32) {
    %c0_i32 = arith.constant 0 : i32
    %c0_i32_0 = arith.constant 0 : i32
    return %arg0, %c0_i32 : i32, i32
  }
  func.func @transform_1(%arg0: i32) -> (i32, i32) {
    %c0_i32 = arith.constant 0 : i32
    %c0_i32_0 = arith.constant 0 : i32
    %c0_i32_1 = arith.constant 0 : i32
    return %c0_i32, %c0_i32_0 : i32, i32
  }
  func.func @transform_2(%arg0: i32) -> (i32, i32) {
    %c0_i32 = arith.constant 0 : i32
    %c0_i32_0 = arith.constant 0 : i32
    %c0_i32_1 = arith.constant 0 : i32
    return %c0_i32, %c0_i32_0 : i32, i32
  }
  func.func @transform_3(%arg0: i32) -> (i32, i32) {
    %c0_i32 = arith.constant 0 : i32
    %c0_i32_0 = arith.constant 0 : i32
    %c0_i32_1 = arith.constant 0 : i32
    return %c0_i32, %c0_i32_0 : i32, i32
  }
  func.func @transform_4(%arg0: i32) -> (i32, i32) {
    %c0_i32 = arith.constant 0 : i32
    %c0_i32_0 = arith.constant 0 : i32
    return %arg0, %c0_i32 : i32, i32
  }
}

</mosaic_0001>

<llo_original>
// kernel: residual_block.1
$region0: #{residual_block.1}
  #allocation0 [shape = 'u32[]', space=smem, size = 0x4, offset = 0x4, fixed_abs, tag = 'smem constant byte address 0x4 - core index']
  #allocation1 [shape = 'u32[144,128]{1,0:T(1,128)}', space=vmem, size = 0x12000, scoped, tag = 'internal scratch']
  %s0 = inlined_call_operand.hbm [shape: f32[256,128], index: 0, kind: input, shape index: {}]
  %s1 = inlined_call_operand.hbm [shape: bf16[128,128], index: 1, kind: input, shape index: {}]
  %s2 = inlined_call_operand.hbm [shape: bf16[128,128], index: 2, kind: input, shape index: {}]
  %s3 = inlined_call_operand.hbm [shape: f32[8,128], index: 3, kind: input, shape index: {}]
  %s4 = inlined_call_operand.hbm [shape: f32[256,128], index: 4, kind: output, shape index: {}]
  %s5 = sld [smem:[#allocation0]]
  $region65: #{residual_block.1} parent=0
    _
  %s7 = ssub.s32 1, %s5
  %s8 = scalar_select 0, %s7, %s5
  $region1: #{residual_block.1} parent=0
    #allocation2 [shape = 'u8[131072]{0}', space=vmem, size = 0x20000, scoped, tag = 'input window, operand 0']
    #allocation3 [shape = 's32[2]{0}', space=sflag, size = 0x8, scoped, tag = 'scoped memory for residual_block.1']
    #allocation4 [shape = 's32[2]{0}', space=sflag, size = 0x8, scoped, tag = 'scoped memory for residual_block.1']
    #allocation5 [shape = 'u8[32768]{0}', space=vmem, size = 0x8000, scoped, tag = 'input window, operand 1, single buffered']
    #allocation6 [shape = 's32[1]{0}', space=sflag, size = 0x4, scoped, tag = 'scoped memory for residual_block.1']
    #allocation7 [shape = 'u8[32768]{0}', space=vmem, size = 0x8000, scoped, tag = 'input window, operand 2, single buffered']
    #allocation8 [shape = 'u8[4096]{0}', space=vmem, size = 0x1000, scoped, tag = 'input window, operand 3, single buffered']
    #allocation9 [shape = 's32[1]{0}', space=sflag, size = 0x4, scoped, tag = 'scoped memory for residual_block.1']
    #allocation10 [shape = 'u8[131072]{0}', space=vmem, size = 0x20000, scoped, tag = 'output window, operand 0']
    %9 = vsyncpa [#allocation3], 0
    %s10 = scalar_lea.sflag [#allocation3], 1
    %11 = vsyncpa %s10, 0
    %12 = vsyncpa [#allocation6], 0
    %13 = vsyncpa [#allocation9], 0
    %14 = vsyncpa [#allocation4], 0
    %s15 = scalar_lea.sflag [#allocation4], 1
    %16 = vsyncpa %s15, 0
    loop: start=0, step=1, limit=4
    $region2: #{residual_block.1} parent=1 // loop_pre_header
      _
    $region3: #{residual_block.1} parent=1 // loop_header
      %s18 = sphi 0, %s22
      %p19 = scmp.ge.s32.totalorder %s18, 4
      %s28 = sphi 0, %s30
      %s31 = sphi 0, %s28
      %s32 = sphi 0, %s31
      %s48 = sphi 0, %s32
      %s52 = sphi 0, %s52
      %s54 = sphi 0, %s52
      %s55 = sphi 0, %s54
      %s69 = sphi 0, %s55
      %s73 = sphi 0, %s73
      %s75 = sphi 0, %s73
      %s76 = sphi 0, %s75
      %s90 = sphi 0, %s76
      %s94 = sphi 0, %s94
      %s96 = sphi 0, %s94
      %s97 = sphi 0, %s96
      %s111 = sphi 0, %s97
      %s117 = sphi 0, %s119
      %s120 = sphi 0, %s117
      %s121 = sphi 0, %s120
      %s137 = sphi 0, %s121
    $region4: #{residual_block.1} parent=1 // loop_header_branch
      %21 = sbr.rel (%p19) target = $region8
    $region5: #{residual_block.1} parent=1 // loop_body
      %s23 = ssub.s32 %s18, 1
      %s24 = ssub.s32 %s18, 2
      %s25 = sadd.s32 %s18, 1
      %s26 = ssub.s32 %s18, %s25
      %p27 = scmp.eq.s32.totalorder %s26, 0
      %s29 = sadd.s32 %s28, 1
      %s30 = scalar_select %p27, %s28, %s29
      %p33 = pneg %p27
      %p34 = scmp.eq.s32.totalorder %s18, 1
      %p35 = por %p33, %p34
      %p36 = scmp.ne.s32.totalorder %s28, %s31
      %p37 = scmp.eq.s32.totalorder %s18, 0
      %p38 = por %p36, %p37
      %p39 = scmp.ne.s32.totalorder %s28, %s31
      %p40 = scmp.eq.s32.totalorder %s23, 1
      %p41 = por %p39, %p40
      %p42 = scmp.ne.s32.totalorder %s31, %s32
      %p43 = scmp.eq.s32.totalorder %s23, 0
      %p44 = por %p42, %p43
      %p45 = scmp.ne.s32.totalorder %s31, %s32
      %p46 = scmp.eq.s32.totalorder %s24, 1
      %p47 = por %p45, %p46
      %p49 = scmp.ne.s32.totalorder %s32, %s48
      %p50 = scmp.eq.s32.totalorder %s24, 0
      %p51 = por %p49, %p50
      %s53 = sadd.s32 %s52, 1
      %p56 = scmp.eq.s32.totalorder %s18, 1
      %p57 = scmp.ne.s32.totalorder %s52, %s54
      %p58 = scmp.eq.s32.totalorder %s18, 0
      %p59 = por %p57, %p58
      %p60 = scmp.ne.s32.totalorder %s52, %s54
      %p61 = scmp.eq.s32.totalorder %s23, 1
      %p62 = por %p60, %p61
      %p63 = scmp.ne.s32.totalorder %s54, %s55
      %p64 = scmp.eq.s32.totalorder %s23, 0
      %p65 = por %p63, %p64
      %p66 = scmp.ne.s32.totalorder %s54, %s55
      %p67 = scmp.eq.s32.totalorder %s24, 1
      %p68 = por %p66, %p67
      %p70 = scmp.ne.s32.totalorder %s55, %s69
      %p71 = scmp.eq.s32.totalorder %s24, 0
      %p72 = por %p70, %p71
      %s74 = sadd.s32 %s73, 1
      %p77 = scmp.eq.s32.totalorder %s18, 1
      %p78 = scmp.ne.s32.totalorder %s73, %s75
      %p79 = scmp.eq.s32.totalorder %s18, 0
      %p80 = por %p78, %p79
      %p81 = scmp.ne.s32.totalorder %s73, %s75
      %p82 = scmp.eq.s32.totalorder %s23, 1
      %p83 = por %p81, %p82
      %p84 = scmp.ne.s32.totalorder %s75, %s76
      %p85 = scmp.eq.s32.totalorder %s23, 0
      %p86 = por %p84, %p85
      %p87 = scmp.ne.s32.totalorder %s75, %s76
      %p88 = scmp.eq.s32.totalorder %s24, 1
      %p89 = por %p87, %p88
      %p91 = scmp.ne.s32.totalorder %s76, %s90
      %p92 = scmp.eq.s32.totalorder %s24, 0
      %p93 = por %p91, %p92
      %s95 = sadd.s32 %s94, 1
      %p98 = scmp.eq.s32.totalorder %s18, 1
      %p99 = scmp.ne.s32.totalorder %s94, %s96
      %p100 = scmp.eq.s32.totalorder %s18, 0
      %p101 = por %p99, %p100
      %p102 = scmp.ne.s32.totalorder %s94, %s96
      %p103 = scmp.eq.s32.totalorder %s23, 1
      %p104 = por %p102, %p103
      %p105 = scmp.ne.s32.totalorder %s96, %s97
      %p106 = scmp.eq.s32.totalorder %s23, 0
      %p107 = por %p105, %p106
      %p108 = scmp.ne.s32.totalorder %s96, %s97
      %p109 = scmp.eq.s32.totalorder %s24, 1
      %p110 = por %p108, %p109
      %p112 = scmp.ne.s32.totalorder %s97, %s111
      %p113 = scmp.eq.s32.totalorder %s24, 0
      %p114 = por %p112, %p113
      %s115 = ssub.s32 %s18, %s25
      %p116 = scmp.eq.s32.totalorder %s115, 0
      %s118 = sadd.s32 %s117, 1
      %s119 = scalar_select %p116, %s117, %s118
      %p122 = pneg %p116
      %p123 = scmp.eq.s32.totalorder %s18, 1
      %p124 = por %p122, %p123
      %p125 = scmp.ne.s32.totalorder %s117, %s120
      %p126 = scmp.eq.s32.totalorder %s18, 0
      %p127 = por %p125, %p126
      %p128 = scmp.ne.s32.totalorder %s117, %s120
      %p129 = scmp.eq.s32.totalorder %s23, 1
      %p130 = por %p128, %p129
      %p131 = scmp.ne.s32.totalorder %s120, %s121
      %p132 = scmp.eq.s32.totalorder %s23, 0
      %p133 = por %p131, %p132
      %p134 = scmp.ne.s32.totalorder %s120, %s121
      %p135 = scmp.eq.s32.totalorder %s24, 1
      %p136 = por %p134, %p135
      %p138 = scmp.ne.s32.totalorder %s121, %s137
      %p139 = scmp.eq.s32.totalorder %s24, 0
      %p140 = por %p138, %p139
      %p141 = scmp.le.s32.totalorder 1, %s18
      %p142 = scmp.lt.s32.totalorder %s18, 3
      %p143 = pnand %p141, %p142
      %p144 = pneg %p143
      // Predicated region
      $region9: #{residual_block.1} parent=5 // pred_check
        _
      $region10: #{residual_block.1} parent=5 // pred_check_branch
        %146 = sbr.rel (%p143) target = $region12
      $region11: #{residual_block.1} parent=5 // pred_region
        %s147 = ssub.s32 %s18, 1
        // Predicated region
        $region13: #{residual_block.1} parent=11 // pred_check
          %p148 = pneg %p65
        $region14: #{residual_block.1} parent=11 // pred_check_branch
          %150 = sbr.rel (%p148) target = $region16
        $region15: #{residual_block.1} parent=11 // pred_region
          %s152 = ssub.s32 1024, 1024
          %153 = vsyncadd [#allocation6], %s152
          %s154 = sshll.u32 [#allocation5], 4
          %s155 = int_to_ptr.vmem [resolvable:$true] %s154
          %160 = dma.hbm_to_vmem [thread:$0]  %s1, 1024, %s155, [#allocation6], 64, 64, 4
        $region16: #{residual_block.1} parent=11 // pred_fallthru
          _
        // Predicated region
        $region17: #{residual_block.1} parent=11 // pred_check
          %p161 = pneg %p86
        $region18: #{residual_block.1} parent=11 // pred_check_branch
          %163 = sbr.rel (%p161) target = $region20
        $region19: #{residual_block.1} parent=11 // pred_region
          %s165 = ssub.s32 1024, 1024
          %166 = vsyncadd [#allocation6], %s165
          %s167 = sshll.u32 [#allocation7], 4
          %s168 = int_to_ptr.vmem [resolvable:$true] %s167
          %173 = dma.hbm_to_vmem [thread:$0]  %s2, 1024, %s168, [#allocation6], 64, 64, 4
        $region20: #{residual_block.1} parent=11 // pred_fallthru
          _
        // Predicated region
        $region21: #{residual_block.1} parent=11 // pred_check
          %p174 = pneg %p107
        $region22: #{residual_block.1} parent=11 // pred_check_branch
          %176 = sbr.rel (%p174) target = $region24
        $region23: #{residual_block.1} parent=11 // pred_region
          %s178 = ssub.s32 128, 128
          %179 = vsyncadd [#allocation9], %s178
          %s181 = sshll.u32 [#allocation8], 4
          %s182 = int_to_ptr.vmem [resolvable:$true] %s181
          %184 = dma.hbm_to_vmem [thread:$0]  %s3, 128, %s182, [#allocation9]
        $region24: #{residual_block.1} parent=11 // pred_fallthru
          _
      $region12: #{residual_block.1} parent=5 // pred_fallthru
        _
      %p185 = scmp.lt.s32.totalorder %s18, 2
      // Predicated region
      $region25: #{residual_block.1} parent=5 // pred_check
        %p186 = pneg %p185
      $region26: #{residual_block.1} parent=5 // pred_check_branch
        %188 = sbr.rel (%p186) target = $region28
      $region27: #{residual_block.1} parent=5 // pred_region
        // Predicated region
        $region29: #{residual_block.1} parent=27 // pred_check
          %p189 = pneg %p38
        $region30: #{residual_block.1} parent=27 // pred_check_branch
          %191 = sbr.rel (%p189) target = $region32
        $region31: #{residual_block.1} parent=27 // pred_region
          %s192 = sand.u32 %s28, 1
          %s193 = scalar_lea.sflag [#allocation3], %s192
          %s194 = sand.u32 %s28, 1
          %s195 = smul.addr %s194, 128
          %s196 = scalar_lea.vmem [#allocation2], %s195
          %s197 = smul.u32 16, %s18
          %s199 = ssub.s32 2048, 2048
          %200 = vsyncadd %s193, %s199
          %s201 = smul.addr %s197, 128
          %s202 = scalar_lea.hbm %s0, %s201
          %s203 = sshll.u32 %s196, 4
          %s204 = int_to_ptr.vmem [resolvable:$true] %s203
          %209 = dma.hbm_to_vmem [thread:$0]  %s202, 2048, %s204, %s193, 128, 128, 8
        $region32: #{residual_block.1} parent=27 // pred_fallthru
          _
      $region28: #{residual_block.1} parent=5 // pred_fallthru
        _
      %p210 = scmp.le.s32.totalorder 1, %s18
      %p211 = scmp.lt.s32.totalorder %s18, 3
      %p212 = pnand %p210, %p211
      %p213 = pneg %p212
      // Predicated region
      $region33: #{residual_block.1} parent=5 // pred_check
        _
      $region34: #{residual_block.1} parent=5 // pred_check_branch
        %215 = sbr.rel (%p212) target = $region36
      $region35: #{residual_block.1} parent=5 // pred_region
        %s216 = ssub.s32 %s18, 1
        %s217 = sand.u32 %s31, 1
        %s218 = scalar_lea.sflag [#allocation3], %s217
        %s219 = sand.u32 %s31, 1
        %s220 = smul.addr %s219, 128
        %s221 = scalar_lea.vmem [#allocation2], %s220
        // Predicated region
        $region37: #{residual_block.1} parent=35 // pred_check
          %p222 = pneg %p44
        $region38: #{residual_block.1} parent=35 // pred_check_branch
          %224 = sbr.rel (%p222) target = $region40
        $region39: #{residual_block.1} parent=35 // pred_region
          %225 = dma.done %s218, 2048
        $region40: #{residual_block.1} parent=35 // pred_fallthru
          _
        // Predicated region
        $region41: #{residual_block.1} parent=35 // pred_check
          %p226 = pneg %p65
        $region42: #{residual_block.1} parent=35 // pred_check_branch
          %228 = sbr.rel (%p226) target = $region44
        $region43: #{residual_block.1} parent=35 // pred_region
          %229 = dma.done [#allocation6], 1024
        $region44: #{residual_block.1} parent=35 // pred_fallthru
          _
        // Predicated region
        $region45: #{residual_block.1} parent=35 // pred_check
          %p230 = pneg %p86
        $region46: #{residual_block.1} parent=35 // pred_check_branch
          %232 = sbr.rel (%p230) target = $region48
        $region47: #{residual_block.1} parent=35 // pred_region
          %233 = dma.done [#allocation6], 1024
        $region48: #{residual_block.1} parent=35 // pred_fallthru
          _
        // Predicated region
        $region49: #{residual_block.1} parent=35 // pred_check
          %p234 = pneg %p107
        $region50: #{residual_block.1} parent=35 // pred_check_branch
          %236 = sbr.rel (%p234) target = $region52
        $region51: #{residual_block.1} parent=35 // pred_region
          %237 = dma.done [#allocation9], 128
        $region52: #{residual_block.1} parent=35 // pred_fallthru
          _
        %s238 = sand.u32 %s31, 1
        %s239 = scalar_lea.sflag [#allocation3], %s238
        %s240 = sand.u32 %s31, 1
        %s241 = smul.addr %s240, 128
        %s242 = scalar_lea.vmem [#allocation2], %s241
        %p243 = pneg %p44
        %p244 = pneg %p41
        %p245 = pneg %p65
        %p246 = pneg %p62
        %p247 = pneg %p86
        %p248 = pneg %p83
        %p249 = pneg %p107
        %p250 = pneg %p104
        %p251 = pneg %p133
        %p252 = pneg %p130
        %s253 = sand.u32 %s120, 1
        %s254 = scalar_lea.sflag [#allocation4], %s253
        %s255 = sand.u32 %s120, 1
        %s256 = smul.addr %s255, 128
        %s257 = scalar_lea.vmem [#allocation10], %s256
        %s258 = smul.u32 16, %s23
        %s259 = smul.u32 16, %s23
        %v261 = vld [vmem:[%s221] sm:$0xff]
        %v262 = vld [vmem:[%s221 + $0x8] sm:$0xff]
        %v263 = vld [vmem:[%s221 + $0x10] sm:$0xff]
        %v264 = vld [vmem:[%s221 + $0x18] sm:$0xff]
        %v265 = vld [vmem:[%s221 + $0x20] sm:$0xff]
        %v266 = vld [vmem:[%s221 + $0x28] sm:$0xff]
        %v267 = vld [vmem:[%s221 + $0x30] sm:$0xff]
        %v268 = vld [vmem:[%s221 + $0x38] sm:$0xff]
        %v269 = vld [vmem:[%s221 + $0x40] sm:$0xff]
        %v270 = vld [vmem:[%s221 + $0x48] sm:$0xff]
        %v271 = vld [vmem:[%s221 + $0x50] sm:$0xff]
        %v272 = vld [vmem:[%s221 + $0x58] sm:$0xff]
        %v273 = vld [vmem:[%s221 + $0x60] sm:$0xff]
        %v274 = vld [vmem:[%s221 + $0x68] sm:$0xff]
        %v275 = vld [vmem:[%s221 + $0x70] sm:$0xff]
        %v276 = vld [vmem:[%s221 + $0x78] sm:$0xff]
        %v277 = vld [vmem:[#allocation8] sm:$0xff]
        %v278 = vpack.c.bf16 %v262, %v261
        %v279 = vpack.c.bf16 %v264, %v263
        %v280 = vpack.c.bf16 %v266, %v265
        %v281 = vpack.c.bf16 %v268, %v267
        %v282 = vpack.c.bf16 %v270, %v269
        %v283 = vpack.c.bf16 %v272, %v271
        %v284 = vpack.c.bf16 %v274, %v273
        %v285 = vpack.c.bf16 %v276, %v275
        %v286 = vld [vmem:[#allocation5] sm:$0xf]
        %v287 = vld [vmem:[#allocation5 + $0x4] sm:$0xf]
        %v288 = vld [vmem:[#allocation5 + $0x8] sm:$0xf]
        %v289 = vld [vmem:[#allocation5 + $0xc] sm:$0xf]
        %v290 = vld [vmem:[#allocation5 + $0x10] sm:$0xf]
        %v291 = vld [vmem:[#allocation5 + $0x14] sm:$0xf]
        %v292 = vld [vmem:[#allocation5 + $0x18] sm:$0xf]
        %v293 = vld [vmem:[#allocation5 + $0x1c] sm:$0xf]
        %v294 = vld [vmem:[#allocation5 + $0x20] sm:$0xf]
        %v295 = vld [vmem:[#allocation5 + $0x24] sm:$0xf]
        %v296 = vld [vmem:[#allocation5 + $0x28] sm:$0xf]
        %v297 = vld [vmem:[#allocation5 + $0x2c] sm:$0xf]
        %v298 = vld [vmem:[#allocation5 + $0x30] sm:$0xf]
        %v299 = vld [vmem:[#allocation5 + $0x34] sm:$0xf]
        %v300 = vld [vmem:[#allocation5 + $0x38] sm:$0xf]
        %v301 = vld [vmem:[#allocation5 + $0x3c] sm:$0xf]
        %v302 = vlaneseq
        %v303 = vshrl.u32 %v302, 7
        %v304 = vsub.s32 0, %v303
        %v305 = vrot.slane %v277, %v304
        %v322 = vunpack.c.l.b16 %v286
        %v323 = vunpack.c.l.b16 %v287
        %v324 = vunpack.c.l.b16 %v288
        %v325 = vunpack.c.l.b16 %v289
        %v326 = vunpack.c.l.b16 %v290
        %v327 = vunpack.c.l.b16 %v291
        %v328 = vunpack.c.l.b16 %v292
        %v329 = vunpack.c.l.b16 %v293
        %v330 = vunpack.c.l.b16 %v294
        %v331 = vunpack.c.l.b16 %v295
        %v332 = vunpack.c.l.b16 %v296
        %v333 = vunpack.c.l.b16 %v297
        %v334 = vunpack.c.l.b16 %v298
        %v335 = vunpack.c.l.b16 %v299
        %v336 = vunpack.c.l.b16 %v300
        %v337 = vunpack.c.l.b16 %v301
        %v338 = vpack.c.b16 %v323, %v322
        %v339 = vpack.c.b16 %v325, %v324
        %v340 = vpack.c.b16 %v327, %v326
        %v341 = vpack.c.b16 %v329, %v328
        %v342 = vpack.c.b16 %v331, %v330
        %v343 = vpack.c.b16 %v333, %v332
        %v344 = vpack.c.b16 %v335, %v334
        %v345 = vpack.c.b16 %v337, %v336
        %354 = vmatprep.subr.bf16.mxu0 0
        %355 = vmatpush1.bf16.msra.mxu0 %v338
        %356 = vmatprep.subr.bf16.mxu0 0
        %357 = vmatpush1.bf16.msra.mxu0 %v339
        %358 = vmatprep.subr.bf16.mxu0 0
        %359 = vmatpush1.bf16.msra.mxu0 %v340
        %360 = vmatprep.subr.bf16.mxu0 0
        %361 = vmatpush1.bf16.msra.mxu0 %v341
        %362 = vmatprep.subr.bf16.mxu0 0
        %363 = vmatpush1.bf16.msra.mxu0 %v342
        %364 = vmatprep.subr.bf16.mxu0 0
        %365 = vmatpush1.bf16.msra.mxu0 %v343
        %366 = vmatprep.subr.bf16.mxu0 0
        %367 = vmatpush1.bf16.msra.mxu0 %v344
        %368 = vmatprep.subr.bf16.mxu0 0
        %369 = vmatpush1.bf16.msra.mxu0 %v345
        %370 = vmatprep.subr.bf16.mxu0 0
        %371 = vmatpush1.bf16.msra.mxu0 0
        %372 = vmatprep.subr.bf16.mxu0 0
        %373 = vmatpush1.bf16.msra.mxu0 0
        %374 = vmatprep.subr.bf16.mxu0 0
        %375 = vmatpush1.bf16.msra.mxu0 0
        %376 = vmatprep.subr.bf16.mxu0 0
        %377 = vmatpush1.bf16.msra.mxu0 0
        %378 = vmatprep.subr.bf16.mxu0 0
        %379 = vmatpush1.bf16.msra.mxu0 0
        %380 = vmatprep.subr.bf16.mxu0 0
        %381 = vmatpush1.bf16.msra.mxu0 0
        %382 = vmatprep.subr.bf16.mxu0 0
        %383 = vmatpush1.bf16.msra.mxu0 0
        %384 = vmatprep.subr.bf16.mxu0 0
        %385 = vmatpush1.bf16.msra.mxu0 0
        %386 = vmatprep.mubr.bf16.mxu0 0
        %387 = vmatmul.mubr.bf16.gmra.mrb[0].mxu0 %v278
        %v388 = vpop.f32.mrb[0].mxu0
        %v389 = vadd.f32 %v305, %v388
        %v390 = vpop.f32.mrb[0].mxu0
        %v391 = vpop.f32.mrb[0].mxu0
        %v392 = vadd.f32 %v305, %v391
        %v393 = vpop.f32.mrb[0].mxu0
        %394 = vmatprep.mubr.bf16.mxu0 0
        %395 = vmatmul.mubr.bf16.gmra.mrb[0].mxu0 %v279
        %v396 = vpop.f32.mrb[0].mxu0
        %v397 = vadd.f32 %v305, %v396
        %v398 = vpop.f32.mrb[0].mxu0
        %v399 = vpop.f32.mrb[0].mxu0
        %v400 = vadd.f32 %v305, %v399
        %v401 = vpop.f32.mrb[0].mxu0
        %402 = vmatprep.mubr.bf16.mxu0 0
        %403 = vmatmul.mubr.bf16.gmra.mrb[0].mxu0 %v280
        %v404 = vpop.f32.mrb[0].mxu0
        %v405 = vadd.f32 %v305, %v404
        %v406 = vpop.f32.mrb[0].mxu0
        %v407 = vpop.f32.mrb[0].mxu0
        %v408 = vadd.f32 %v305, %v407
        %v409 = vpop.f32.mrb[0].mxu0
        %410 = vmatprep.mubr.bf16.mxu0 0
        %411 = vmatmul.mubr.bf16.gmra.mrb[0].mxu0 %v281
        %v412 = vpop.f32.mrb[0].mxu0
        %v413 = vadd.f32 %v305, %v412
        %v414 = vpop.f32.mrb[0].mxu0
        %v415 = vpop.f32.mrb[0].mxu0
        %v416 = vadd.f32 %v305, %v415
        %v417 = vpop.f32.mrb[0].mxu0
        %418 = vmatprep.mubr.bf16.mxu0 0
        %419 = vmatmul.mubr.bf16.gmra.mrb[0].mxu0 %v282
        %v420 = vpop.f32.mrb[0].mxu0
        %v421 = vadd.f32 %v305, %v420
        %v422 = vpop.f32.mrb[0].mxu0
        %v423 = vpop.f32.mrb[0].mxu0
        %v424 = vadd.f32 %v305, %v423
        %v425 = vpop.f32.mrb[0].mxu0
        %426 = vmatprep.mubr.bf16.mxu0 0
        %427 = vmatmul.mubr.bf16.gmra.mrb[0].mxu0 %v283
        %v428 = vpop.f32.mrb[0].mxu0
        %v429 = vadd.f32 %v305, %v428
        %v430 = vpop.f32.mrb[0].mxu0
        %v431 = vpop.f32.mrb[0].mxu0
        %v432 = vadd.f32 %v305, %v431
        %v433 = vpop.f32.mrb[0].mxu0
        %434 = vmatprep.mubr.bf16.mxu0 0
        %435 = vmatmul.mubr.bf16.gmra.mrb[0].mxu0 %v284
        %v436 = vpop.f32.mrb[0].mxu0
        %v437 = vadd.f32 %v305, %v436
        %v438 = vpop.f32.mrb[0].mxu0
        %v439 = vpop.f32.mrb[0].mxu0
        %v440 = vadd.f32 %v305, %v439
        %v441 = vpop.f32.mrb[0].mxu0
        %442 = vmatprep.mubr.bf16.mxu0 0
        %443 = vmatmul.mubr.bf16.gmra.mrb[0].mxu0 %v285
        %v444 = vpop.f32.mrb[0].mxu0
        %v445 = vadd.f32 %v305, %v444
        %v446 = vpop.f32.mrb[0].mxu0
        %v447 = vpop.f32.mrb[0].mxu0
        %v448 = vadd.f32 %v305, %v447
        %v449 = vpop.f32.mrb[0].mxu0
        %450 = vdwg.mxu0
        %451 = vadd.xlane.f32.xlu0 %v389
        %v452 = vpop.xlane.xlu0 %451
        %453 = vadd.xlane.f32.xlu0 %v392
        %v454 = vpop.xlane.xlu0 %453
        %455 = vadd.xlane.f32.xlu0 %v397
        %v456 = vpop.xlane.xlu0 %455
        %457 = vadd.xlane.f32.xlu0 %v400
        %v458 = vpop.xlane.xlu0 %457
        %459 = vadd.xlane.f32.xlu0 %v405
        %v460 = vpop.xlane.xlu0 %459
        %461 = vadd.xlane.f32.xlu0 %v408
        %v462 = vpop.xlane.xlu0 %461
        %463 = vadd.xlane.f32.xlu0 %v413
        %v464 = vpop.xlane.xlu0 %463
        %465 = vadd.xlane.f32.xlu0 %v416
        %v466 = vpop.xlane.xlu0 %465
        %467 = vadd.xlane.f32.xlu0 %v421
        %v468 = vpop.xlane.xlu0 %467
        %469 = vadd.xlane.f32.xlu0 %v424
        %v470 = vpop.xlane.xlu0 %469
        %471 = vadd.xlane.f32.xlu0 %v429
        %v472 = vpop.xlane.xlu0 %471
        %473 = vadd.xlane.f32.xlu0 %v432
        %v474 = vpop.xlane.xlu0 %473
        %475 = vadd.xlane.f32.xlu0 %v437
        %v476 = vpop.xlane.xlu0 %475
        %477 = vadd.xlane.f32.xlu0 %v440
        %v478 = vpop.xlane.xlu0 %477
        %479 = vadd.xlane.f32.xlu0 %v445
        %v480 = vpop.xlane.xlu0 %479
        %481 = vadd.xlane.f32.xlu0 %v448
        %v482 = vpop.xlane.xlu0 %481
        %v483 = vrcp.pop 128.0
        %v484 = vmul.f32 %v452, %v483
        %v485 = vmul.f32 %v454, %v483
        %v486 = vmul.f32 %v456, %v483
        %v487 = vmul.f32 %v458, %v483
        %v488 = vmul.f32 %v460, %v483
        %v489 = vmul.f32 %v462, %v483
        %v490 = vmul.f32 %v464, %v483
        %v491 = vmul.f32 %v466, %v483
        %v492 = vmul.f32 %v468, %v483
        %v493 = vmul.f32 %v470, %v483
        %v494 = vmul.f32 %v472, %v483
        %v495 = vmul.f32 %v474, %v483
        %v496 = vmul.f32 %v476, %v483
        %v497 = vmul.f32 %v478, %v483
        %v498 = vmul.f32 %v480, %v483
        %v499 = vmul.f32 %v482, %v483
        %v500 = vsub.f32 %v389, %v484
        %v501 = vsub.f32 %v392, %v485
        %v502 = vsub.f32 %v397, %v486
        %v503 = vsub.f32 %v400, %v487
        %v504 = vsub.f32 %v405, %v488
        %v505 = vsub.f32 %v408, %v489
        %v506 = vsub.f32 %v413, %v490
        %v507 = vsub.f32 %v416, %v491
        %v508 = vsub.f32 %v421, %v492
        %v509 = vsub.f32 %v424, %v493
        %v510 = vsub.f32 %v429, %v494
        %v511 = vsub.f32 %v432, %v495
        %v512 = vsub.f32 %v437, %v496
        %v513 = vsub.f32 %v440, %v497
        %v514 = vsub.f32 %v445, %v498
        %v515 = vsub.f32 %v448, %v499
        %v516 = vmul.f32 %v500, %v500
        %v517 = vmul.f32 %v501, %v501
        %v518 = vmul.f32 %v502, %v502
        %v519 = vmul.f32 %v503, %v503
        %v520 = vmul.f32 %v504, %v504
        %v521 = vmul.f32 %v505, %v505
        %v522 = vmul.f32 %v506, %v506
        %v523 = vmul.f32 %v507, %v507
        %v524 = vmul.f32 %v508, %v508
        %v525 = vmul.f32 %v509, %v509
        %v526 = vmul.f32 %v510, %v510
        %v527 = vmul.f32 %v511, %v511
        %v528 = vmul.f32 %v512, %v512
        %v529 = vmul.f32 %v513, %v513
        %v530 = vmul.f32 %v514, %v514
        %v531 = vmul.f32 %v515, %v515
        %532 = vadd.xlane.f32.xlu0 %v516
        %v533 = vpop.xlane.xlu0 %532
        %534 = vadd.xlane.f32.xlu0 %v517
        %v535 = vpop.xlane.xlu0 %534
        %536 = vadd.xlane.f32.xlu0 %v518
        %v537 = vpop.xlane.xlu0 %536
        %538 = vadd.xlane.f32.xlu0 %v519
        %v539 = vpop.xlane.xlu0 %538
        %540 = vadd.xlane.f32.xlu0 %v520
        %v541 = vpop.xlane.xlu0 %540
        %542 = vadd.xlane.f32.xlu0 %v521
        %v543 = vpop.xlane.xlu0 %542
        %544 = vadd.xlane.f32.xlu0 %v522
        %v545 = vpop.xlane.xlu0 %544
        %546 = vadd.xlane.f32.xlu0 %v523
        %v547 = vpop.xlane.xlu0 %546
        %548 = vadd.xlane.f32.xlu0 %v524
        %v549 = vpop.xlane.xlu0 %548
        %550 = vadd.xlane.f32.xlu0 %v525
        %v551 = vpop.xlane.xlu0 %550
        %552 = vadd.xlane.f32.xlu0 %v526
        %v553 = vpop.xlane.xlu0 %552
        %554 = vadd.xlane.f32.xlu0 %v527
        %v555 = vpop.xlane.xlu0 %554
        %556 = vadd.xlane.f32.xlu0 %v528
        %v557 = vpop.xlane.xlu0 %556
        %558 = vadd.xlane.f32.xlu0 %v529
        %v559 = vpop.xlane.xlu0 %558
        %560 = vadd.xlane.f32.xlu0 %v530
        %v561 = vpop.xlane.xlu0 %560
        %562 = vadd.xlane.f32.xlu0 %v531
        %v563 = vpop.xlane.xlu0 %562
        %v564 = vmul.f32 %v533, %v483
        %v565 = vmul.f32 %v535, %v483
        %v566 = vmul.f32 %v537, %v483
        %v567 = vmul.f32 %v539, %v483
        %v568 = vmul.f32 %v541, %v483
        %v569 = vmul.f32 %v543, %v483
        %v570 = vmul.f32 %v545, %v483
        %v571 = vmul.f32 %v547, %v483
        %v572 = vmul.f32 %v549, %v483
        %v573 = vmul.f32 %v551, %v483
        %v574 = vmul.f32 %v553, %v483
        %v575 = vmul.f32 %v555, %v483
        %v576 = vmul.f32 %v557, %v483
        %v577 = vmul.f32 %v559, %v483
        %v578 = vmul.f32 %v561, %v483
        %v579 = vmul.f32 %v563, %v483
        %v580 = vadd.f32 %v564, 1e-05
        %v581 = vadd.f32 %v565, 1e-05
        %v582 = vadd.f32 %v566, 1e-05
        %v583 = vadd.f32 %v567, 1e-05
        %v584 = vadd.f32 %v568, 1e-05
        %v585 = vadd.f32 %v569, 1e-05
        %v586 = vadd.f32 %v570, 1e-05
        %v587 = vadd.f32 %v571, 1e-05
        %v588 = vadd.f32 %v572, 1e-05
        %v589 = vadd.f32 %v573, 1e-05
        %v590 = vadd.f32 %v574, 1e-05
        %v591 = vadd.f32 %v575, 1e-05
        %v592 = vadd.f32 %v576, 1e-05
        %v593 = vadd.f32 %v577, 1e-05
        %v594 = vadd.f32 %v578, 1e-05
        %v595 = vadd.f32 %v579, 1e-05
        %v596 = vrsqrt.pop %v580
        %v597 = vrsqrt.pop %v581
        %v598 = vrsqrt.pop %v582
        %v599 = vrsqrt.pop %v583
        %v600 = vrsqrt.pop %v584
        %v601 = vrsqrt.pop %v585
        %v602 = vrsqrt.pop %v586
        %v603 = vrsqrt.pop %v587
        %v604 = vrsqrt.pop %v588
        %v605 = vrsqrt.pop %v589
        %v606 = vrsqrt.pop %v590
        %v607 = vrsqrt.pop %v591
        %v608 = vrsqrt.pop %v592
        %v609 = vrsqrt.pop %v593
        %v610 = vrsqrt.pop %v594
        %v611 = vrsqrt.pop %v595
        %v612 = vmul.f32 %v500, %v596
        %v613 = vmul.f32 %v501, %v597
        %v614 = vmul.f32 %v502, %v598
        %v615 = vmul.f32 %v503, %v599
        %v616 = vmul.f32 %v504, %v600
        %v617 = vmul.f32 %v505, %v601
        %v618 = vmul.f32 %v506, %v602
        %v619 = vmul.f32 %v507, %v603
        %v620 = vmul.f32 %v508, %v604
        %v621 = vmul.f32 %v509, %v605
        %v622 = vmul.f32 %v510, %v606
        %v623 = vmul.f32 %v511, %v607
        %v624 = vmul.f32 %v512, %v608
        %v625 = vmul.f32 %v513, %v609
        %v626 = vmul.f32 %v514, %v610
        %v627 = vmul.f32 %v515, %v611
        %v628 = vlaneseq
        %v629 = vshrl.u32 %v628, 7
        %v630 = vsub.s32 1, %v629
        %v631 = vrot.slane %v277, %v630
        %v632 = vmul.f32 %v612, %v631
        %v633 = vmul.f32 %v613, %v631
        %v634 = vmul.f32 %v614, %v631
        %v635 = vmul.f32 %v615, %v631
        %v636 = vmul.f32 %v616, %v631
        %v637 = vmul.f32 %v617, %v631
        %v638 = vmul.f32 %v618, %v631
        %v639 = vmul.f32 %v619, %v631
        %v640 = vmul.f32 %v620, %v631
        %v641 = vmul.f32 %v621, %v631
        %v642 = vmul.f32 %v622, %v631
        %v643 = vmul.f32 %v623, %v631
        %v644 = vmul.f32 %v624, %v631
        %v645 = vmul.f32 %v625, %v631
        %v646 = vmul.f32 %v626, %v631
        %v647 = vmul.f32 %v627, %v631
        %v648 = vlaneseq
        %v649 = vshrl.u32 %v648, 7
        %v650 = vsub.s32 2, %v649
        %v651 = vrot.slane %v277, %v650
        %v652 = vadd.f32 %v632, %v651
        %v653 = vadd.f32 %v633, %v651
        %v654 = vadd.f32 %v634, %v651
        %v655 = vadd.f32 %v635, %v651
        %v656 = vadd.f32 %v636, %v651
        %v657 = vadd.f32 %v637, %v651
        %v658 = vadd.f32 %v638, %v651
        %v659 = vadd.f32 %v639, %v651
        %v660 = vadd.f32 %v640, %v651
        %v661 = vadd.f32 %v641, %v651
        %v662 = vadd.f32 %v642, %v651
        %v663 = vadd.f32 %v643, %v651
        %v664 = vadd.f32 %v644, %v651
        %v665 = vadd.f32 %v645, %v651
        %v666 = vadd.f32 %v646, %v651
        %v667 = vadd.f32 %v647, %v651
        %v668 = vmul.f32 %v652, 0.2
        %v669 = vmul.f32 %v653, 0.2
        %v670 = vmul.f32 %v654, 0.2
        %v671 = vmul.f32 %v655, 0.2
        %v672 = vmul.f32 %v656, 0.2
        %v673 = vmul.f32 %v657, 0.2
        %v674 = vmul.f32 %v658, 0.2
        %v675 = vmul.f32 %v659, 0.2
        %v676 = vmul.f32 %v660, 0.2
        %v677 = vmul.f32 %v661, 0.2
        %v678 = vmul.f32 %v662, 0.2
        %v679 = vmul.f32 %v663, 0.2
        %v680 = vmul.f32 %v664, 0.2
        %v681 = vmul.f32 %v665, 0.2
        %v682 = vmul.f32 %v666, 0.2
        %v683 = vmul.f32 %v667, 0.2
        %v684 = vmax.f32 %v652, %v668
        %v685 = vmax.f32 %v653, %v669
        %v686 = vmax.f32 %v654, %v670
        %v687 = vmax.f32 %v655, %v671
        %v688 = vmax.f32 %v656, %v672
        %v689 = vmax.f32 %v657, %v673
        %v690 = vmax.f32 %v658, %v674
        %v691 = vmax.f32 %v659, %v675
        %v692 = vmax.f32 %v660, %v676
        %v693 = vmax.f32 %v661, %v677
        %v694 = vmax.f32 %v662, %v678
        %v695 = vmax.f32 %v663, %v679
        %v696 = vmax.f32 %v664, %v680
        %v697 = vmax.f32 %v665, %v681
        %v698 = vmax.f32 %v666, %v682
        %v699 = vmax.f32 %v667, %v683
        %v700 = vpack.c.bf16 %v685, %v684
        %v701 = vpack.c.bf16 %v687, %v686
        %v702 = vpack.c.bf16 %v689, %v688
        %v703 = vpack.c.bf16 %v691, %v690
        %v704 = vpack.c.bf16 %v693, %v692
        %v705 = vpack.c.bf16 %v695, %v694
        %v706 = vpack.c.bf16 %v697, %v696
        %v707 = vpack.c.bf16 %v699, %v698
        %v708 = vld [vmem:[#allocation7] sm:$0xf]
        %v709 = vld [vmem:[#allocation7 + $0x4] sm:$0xf]
        %v710 = vld [vmem:[#allocation7 + $0x8] sm:$0xf]
        %v711 = vld [vmem:[#allocation7 + $0xc] sm:$0xf]
        %v712 = vld [vmem:[#allocation7 + $0x10] sm:$0xf]
        %v713 = vld [vmem:[#allocation7 + $0x14] sm:$0xf]
        %v714 = vld [vmem:[#allocation7 + $0x18] sm:$0xf]
        %v715 = vld [vmem:[#allocation7 + $0x1c] sm:$0xf]
        %v716 = vld [vmem:[#allocation7 + $0x20] sm:$0xf]
        %v717 = vld [vmem:[#allocation7 + $0x24] sm:$0xf]
        %v718 = vld [vmem:[#allocation7 + $0x28] sm:$0xf]
        %v719 = vld [vmem:[#allocation7 + $0x2c] sm:$0xf]
        %v720 = vld [vmem:[#allocation7 + $0x30] sm:$0xf]
        %v721 = vld [vmem:[#allocation7 + $0x34] sm:$0xf]
        %v722 = vld [vmem:[#allocation7 + $0x38] sm:$0xf]
        %v723 = vld [vmem:[#allocation7 + $0x3c] sm:$0xf]
        %v724 = vlaneseq
        %v725 = vshrl.u32 %v724, 7
        %v726 = vsub.s32 3, %v725
        %v727 = vrot.slane %v277, %v726
        %v744 = vunpack.c.l.b16 %v708
        %v745 = vunpack.c.l.b16 %v709
        %v746 = vunpack.c.l.b16 %v710
        %v747 = vunpack.c.l.b16 %v711
        %v748 = vunpack.c.l.b16 %v712
        %v749 = vunpack.c.l.b16 %v713
        %v750 = vunpack.c.l.b16 %v714
        %v751 = vunpack.c.l.b16 %v715
        %v752 = vunpack.c.l.b16 %v716
        %v753 = vunpack.c.l.b16 %v717
        %v754 = vunpack.c.l.b16 %v718
        %v755 = vunpack.c.l.b16 %v719
        %v756 = vunpack.c.l.b16 %v720
        %v757 = vunpack.c.l.b16 %v721
        %v758 = vunpack.c.l.b16 %v722
        %v759 = vunpack.c.l.b16 %v723
        %v760 = vpack.c.b16 %v745, %v744
        %v761 = vpack.c.b16 %v747, %v746
        %v762 = vpack.c.b16 %v749, %v748
        %v763 = vpack.c.b16 %v751, %v750
        %v764 = vpack.c.b16 %v753, %v752
        %v765 = vpack.c.b16 %v755, %v754
        %v766 = vpack.c.b16 %v757, %v756
        %v767 = vpack.c.b16 %v759, %v758
        %776 = vmatprep.subr.bf16.mxu0 0
        %777 = vmatpush1.bf16.msra.mxu0 %v760
        %778 = vmatprep.subr.bf16.mxu0 0
        %779 = vmatpush1.bf16.msra.mxu0 %v761
        %780 = vmatprep.subr.bf16.mxu0 0
        %781 = vmatpush1.bf16.msra.mxu0 %v762
        %782 = vmatprep.subr.bf16.mxu0 0
        %783 = vmatpush1.bf16.msra.mxu0 %v763
        %784 = vmatprep.subr.bf16.mxu0 0
        %785 = vmatpush1.bf16.msra.mxu0 %v764
        %786 = vmatprep.subr.bf16.mxu0 0
        %787 = vmatpush1.bf16.msra.mxu0 %v765
        %788 = vmatprep.subr.bf16.mxu0 0
        %789 = vmatpush1.bf16.msra.mxu0 %v766
        %790 = vmatprep.subr.bf16.mxu0 0
        %791 = vmatpush1.bf16.msra.mxu0 %v767
        %792 = vmatprep.subr.bf16.mxu0 0
        %793 = vmatpush1.bf16.msra.mxu0 0
        %794 = vmatprep.subr.bf16.mxu0 0
        %795 = vmatpush1.bf16.msra.mxu0 0
        %796 = vmatprep.subr.bf16.mxu0 0
        %797 = vmatpush1.bf16.msra.mxu0 0
        %798 = vmatprep.subr.bf16.mxu0 0
        %799 = vmatpush1.bf16.msra.mxu0 0
        %800 = vmatprep.subr.bf16.mxu0 0
        %801 = vmatpush1.bf16.msra.mxu0 0
        %802 = vmatprep.subr.bf16.mxu0 0
        %803 = vmatpush1.bf16.msra.mxu0 0
        %804 = vmatprep.subr.bf16.mxu0 0
        %805 = vmatpush1.bf16.msra.mxu0 0
        %806 = vmatprep.subr.bf16.mxu0 0
        %807 = vmatpush1.bf16.msra.mxu0 0
        %808 = vmatprep.mubr.bf16.mxu0 0
        %809 = vmatmul.mubr.bf16.gmra.mrb[0].mxu0 %v700
        %v810 = vpop.f32.mrb[0].mxu0
        %v811 = vadd.f32 %v727, %v810
        %v812 = vpop.f32.mrb[0].mxu0
        %v813 = vpop.f32.mrb[0].mxu0
        %v814 = vadd.f32 %v727, %v813
        %v815 = vpop.f32.mrb[0].mxu0
        %816 = vmatprep.mubr.bf16.mxu0 0
        %817 = vmatmul.mubr.bf16.gmra.mrb[0].mxu0 %v701
        %v818 = vpop.f32.mrb[0].mxu0
        %v819 = vadd.f32 %v727, %v818
        %v820 = vpop.f32.mrb[0].mxu0
        %v821 = vpop.f32.mrb[0].mxu0
        %v822 = vadd.f32 %v727, %v821
        %v823 = vpop.f32.mrb[0].mxu0
        %824 = vmatprep.mubr.bf16.mxu0 0
        %825 = vmatmul.mubr.bf16.gmra.mrb[0].mxu0 %v702
        %v826 = vpop.f32.mrb[0].mxu0
        %v827 = vadd.f32 %v727, %v826
        %v828 = vpop.f32.mrb[0].mxu0
        %v829 = vpop.f32.mrb[0].mxu0
        %v830 = vadd.f32 %v727, %v829
        %v831 = vpop.f32.mrb[0].mxu0
        %832 = vmatprep.mubr.bf16.mxu0 0
        %833 = vmatmul.mubr.bf16.gmra.mrb[0].mxu0 %v703
        %v834 = vpop.f32.mrb[0].mxu0
        %v835 = vadd.f32 %v727, %v834
        %v836 = vpop.f32.mrb[0].mxu0
        %v837 = vpop.f32.mrb[0].mxu0
        %v838 = vadd.f32 %v727, %v837
        %v839 = vpop.f32.mrb[0].mxu0
        %840 = vmatprep.mubr.bf16.mxu0 0
        %841 = vmatmul.mubr.bf16.gmra.mrb[0].mxu0 %v704
        %v842 = vpop.f32.mrb[0].mxu0
        %v843 = vadd.f32 %v727, %v842
        %v844 = vpop.f32.mrb[0].mxu0
        %v845 = vpop.f32.mrb[0].mxu0
        %v846 = vadd.f32 %v727, %v845
        %v847 = vpop.f32.mrb[0].mxu0
        %848 = vmatprep.mubr.bf16.mxu0 0
        %849 = vmatmul.mubr.bf16.gmra.mrb[0].mxu0 %v705
        %v850 = vpop.f32.mrb[0].mxu0
        %v851 = vadd.f32 %v727, %v850
        %v852 = vpop.f32.mrb[0].mxu0
        %v853 = vpop.f32.mrb[0].mxu0
        %v854 = vadd.f32 %v727, %v853
        %v855 = vpop.f32.mrb[0].mxu0
        %856 = vmatprep.mubr.bf16.mxu0 0
        %857 = vmatmul.mubr.bf16.gmra.mrb[0].mxu0 %v706
        %v858 = vpop.f32.mrb[0].mxu0
        %v859 = vadd.f32 %v727, %v858
        %v860 = vpop.f32.mrb[0].mxu0
        %v861 = vpop.f32.mrb[0].mxu0
        %v862 = vadd.f32 %v727, %v861
        %v863 = vpop.f32.mrb[0].mxu0
        %864 = vmatprep.mubr.bf16.mxu0 0
        %865 = vmatmul.mubr.bf16.gmra.mrb[0].mxu0 %v707
        %v866 = vpop.f32.mrb[0].mxu0
        %v867 = vadd.f32 %v727, %v866
        %v868 = vpop.f32.mrb[0].mxu0
        %v869 = vpop.f32.mrb[0].mxu0
        %v870 = vadd.f32 %v727, %v869
        %v871 = vpop.f32.mrb[0].mxu0
        %872 = vdwg.mxu0
        %873 = vadd.xlane.f32.xlu0 %v811
        %v874 = vpop.xlane.xlu0 %873
        %875 = vadd.xlane.f32.xlu0 %v814
        %v876 = vpop.xlane.xlu0 %875
        %877 = vadd.xlane.f32.xlu0 %v819
        %v878 = vpop.xlane.xlu0 %877
        %879 = vadd.xlane.f32.xlu0 %v822
        %v880 = vpop.xlane.xlu0 %879
        %881 = vadd.xlane.f32.xlu0 %v827
        %v882 = vpop.xlane.xlu0 %881
        %883 = vadd.xlane.f32.xlu0 %v830
        %v884 = vpop.xlane.xlu0 %883
        %885 = vadd.xlane.f32.xlu0 %v835
        %v886 = vpop.xlane.xlu0 %885
        %887 = vadd.xlane.f32.xlu0 %v838
        %v888 = vpop.xlane.xlu0 %887
        %889 = vadd.xlane.f32.xlu0 %v843
        %v890 = vpop.xlane.xlu0 %889
        %891 = vadd.xlane.f32.xlu0 %v846
        %v892 = vpop.xlane.xlu0 %891
        %893 = vadd.xlane.f32.xlu0 %v851
        %v894 = vpop.xlane.xlu0 %893
        %895 = vadd.xlane.f32.xlu0 %v854
        %v896 = vpop.xlane.xlu0 %895
        %897 = vadd.xlane.f32.xlu0 %v859
        %v898 = vpop.xlane.xlu0 %897
        %899 = vadd.xlane.f32.xlu0 %v862
        %v900 = vpop.xlane.xlu0 %899
        %901 = vadd.xlane.f32.xlu0 %v867
        %v902 = vpop.xlane.xlu0 %901
        %903 = vadd.xlane.f32.xlu0 %v870
        %v904 = vpop.xlane.xlu0 %903
        %v905 = vmul.f32 %v874, %v483
        %v906 = vmul.f32 %v876, %v483
        %v907 = vmul.f32 %v878, %v483
        %v908 = vmul.f32 %v880, %v483
        %v909 = vmul.f32 %v882, %v483
        %v910 = vmul.f32 %v884, %v483
        %v911 = vmul.f32 %v886, %v483
        %v912 = vmul.f32 %v888, %v483
        %v913 = vmul.f32 %v890, %v483
        %v914 = vmul.f32 %v892, %v483
        %v915 = vmul.f32 %v894, %v483
        %v916 = vmul.f32 %v896, %v483
        %v917 = vmul.f32 %v898, %v483
        %v918 = vmul.f32 %v900, %v483
        %v919 = vmul.f32 %v902, %v483
        %v920 = vmul.f32 %v904, %v483
        %v921 = vsub.f32 %v811, %v905
        %v922 = vsub.f32 %v814, %v906
        %v923 = vsub.f32 %v819, %v907
        %v924 = vsub.f32 %v822, %v908
        %v925 = vsub.f32 %v827, %v909
        %v926 = vsub.f32 %v830, %v910
        %v927 = vsub.f32 %v835, %v911
        %v928 = vsub.f32 %v838, %v912
        %v929 = vsub.f32 %v843, %v913
        %v930 = vsub.f32 %v846, %v914
        %v931 = vsub.f32 %v851, %v915
        %v932 = vsub.f32 %v854, %v916
        %v933 = vsub.f32 %v859, %v917
        %v934 = vsub.f32 %v862, %v918
        %v935 = vsub.f32 %v867, %v919
        %v936 = vsub.f32 %v870, %v920
        %v937 = vmul.f32 %v921, %v921
        %v938 = vmul.f32 %v922, %v922
        %v939 = vmul.f32 %v923, %v923
        %v940 = vmul.f32 %v924, %v924
        %v941 = vmul.f32 %v925, %v925
        %v942 = vmul.f32 %v926, %v926
        %v943 = vmul.f32 %v927, %v927
        %v944 = vmul.f32 %v928, %v928
        %v945 = vmul.f32 %v929, %v929
        %v946 = vmul.f32 %v930, %v930
        %v947 = vmul.f32 %v931, %v931
        %v948 = vmul.f32 %v932, %v932
        %v949 = vmul.f32 %v933, %v933
        %v950 = vmul.f32 %v934, %v934
        %v951 = vmul.f32 %v935, %v935
        %v952 = vmul.f32 %v936, %v936
        %953 = vadd.xlane.f32.xlu0 %v937
        %v954 = vpop.xlane.xlu0 %953
        %955 = vadd.xlane.f32.xlu0 %v938
        %v956 = vpop.xlane.xlu0 %955
        %957 = vadd.xlane.f32.xlu0 %v939
        %v958 = vpop.xlane.xlu0 %957
        %959 = vadd.xlane.f32.xlu0 %v940
        %v960 = vpop.xlane.xlu0 %959
        %961 = vadd.xlane.f32.xlu0 %v941
        %v962 = vpop.xlane.xlu0 %961
        %963 = vadd.xlane.f32.xlu0 %v942
        %v964 = vpop.xlane.xlu0 %963
        %965 = vadd.xlane.f32.xlu0 %v943
        %v966 = vpop.xlane.xlu0 %965
        %967 = vadd.xlane.f32.xlu0 %v944
        %v968 = vpop.xlane.xlu0 %967
        %969 = vadd.xlane.f32.xlu0 %v945
        %v970 = vpop.xlane.xlu0 %969
        %971 = vadd.xlane.f32.xlu0 %v946
        %v972 = vpop.xlane.xlu0 %971
        %973 = vadd.xlane.f32.xlu0 %v947
        %v974 = vpop.xlane.xlu0 %973
        %975 = vadd.xlane.f32.xlu0 %v948
        %v976 = vpop.xlane.xlu0 %975
        %977 = vadd.xlane.f32.xlu0 %v949
        %v978 = vpop.xlane.xlu0 %977
        %979 = vadd.xlane.f32.xlu0 %v950
        %v980 = vpop.xlane.xlu0 %979
        %981 = vadd.xlane.f32.xlu0 %v951
        %v982 = vpop.xlane.xlu0 %981
        %983 = vadd.xlane.f32.xlu0 %v952
        %v984 = vpop.xlane.xlu0 %983
        %v985 = vmul.f32 %v954, %v483
        %v986 = vmul.f32 %v956, %v483
        %v987 = vmul.f32 %v958, %v483
        %v988 = vmul.f32 %v960, %v483
        %v989 = vmul.f32 %v962, %v483
        %v990 = vmul.f32 %v964, %v483
        %v991 = vmul.f32 %v966, %v483
        %v992 = vmul.f32 %v968, %v483
        %v993 = vmul.f32 %v970, %v483
        %v994 = vmul.f32 %v972, %v483
        %v995 = vmul.f32 %v974, %v483
        %v996 = vmul.f32 %v976, %v483
        %v997 = vmul.f32 %v978, %v483
        %v998 = vmul.f32 %v980, %v483
        %v999 = vmul.f32 %v982, %v483
        %v1000 = vmul.f32 %v984, %v483
        %v1001 = vadd.f32 %v985, 1e-05
        %v1002 = vadd.f32 %v986, 1e-05
        %v1003 = vadd.f32 %v987, 1e-05
        %v1004 = vadd.f32 %v988, 1e-05
        %v1005 = vadd.f32 %v989, 1e-05
        %v1006 = vadd.f32 %v990, 1e-05
        %v1007 = vadd.f32 %v991, 1e-05
        %v1008 = vadd.f32 %v992, 1e-05
        %v1009 = vadd.f32 %v993, 1e-05
        %v1010 = vadd.f32 %v994, 1e-05
        %v1011 = vadd.f32 %v995, 1e-05
        %v1012 = vadd.f32 %v996, 1e-05
        %v1013 = vadd.f32 %v997, 1e-05
        %v1014 = vadd.f32 %v998, 1e-05
        %v1015 = vadd.f32 %v999, 1e-05
        %v1016 = vadd.f32 %v1000, 1e-05
        %v1017 = vrsqrt.pop %v1001
        %v1018 = vrsqrt.pop %v1002
        %v1019 = vrsqrt.pop %v1003
        %v1020 = vrsqrt.pop %v1004
        %v1021 = vrsqrt.pop %v1005
        %v1022 = vrsqrt.pop %v1006
        %v1023 = vrsqrt.pop %v1007
        %v1024 = vrsqrt.pop %v1008
        %v1025 = vrsqrt.pop %v1009
        %v1026 = vrsqrt.pop %v1010
        %v1027 = vrsqrt.pop %v1011
        %v1028 = vrsqrt.pop %v1012
        %v1029 = vrsqrt.pop %v1013
        %v1030 = vrsqrt.pop %v1014
        %v1031 = vrsqrt.pop %v1015
        %v1032 = vrsqrt.pop %v1016
        %v1033 = vmul.f32 %v921, %v1017
        %v1034 = vmul.f32 %v922, %v1018
        %v1035 = vmul.f32 %v923, %v1019
        %v1036 = vmul.f32 %v924, %v1020
        %v1037 = vmul.f32 %v925, %v1021
        %v1038 = vmul.f32 %v926, %v1022
        %v1039 = vmul.f32 %v927, %v1023
        %v1040 = vmul.f32 %v928, %v1024
        %v1041 = vmul.f32 %v929, %v1025
        %v1042 = vmul.f32 %v930, %v1026
        %v1043 = vmul.f32 %v931, %v1027
        %v1044 = vmul.f32 %v932, %v1028
        %v1045 = vmul.f32 %v933, %v1029
        %v1046 = vmul.f32 %v934, %v1030
        %v1047 = vmul.f32 %v935, %v1031
        %v1048 = vmul.f32 %v936, %v1032
        %v1049 = vlaneseq
        %v1050 = vshrl.u32 %v1049, 7
        %v1051 = vsub.s32 4, %v1050
        %v1052 = vrot.slane %v277, %v1051
        %v1053 = vmul.f32 %v1033, %v1052
        %v1054 = vmul.f32 %v1034, %v1052
        %v1055 = vmul.f32 %v1035, %v1052
        %v1056 = vmul.f32 %v1036, %v1052
        %v1057 = vmul.f32 %v1037, %v1052
        %v1058 = vmul.f32 %v1038, %v1052
        %v1059 = vmul.f32 %v1039, %v1052
        %v1060 = vmul.f32 %v1040, %v1052
        %v1061 = vmul.f32 %v1041, %v1052
        %v1062 = vmul.f32 %v1042, %v1052
        %v1063 = vmul.f32 %v1043, %v1052
        %v1064 = vmul.f32 %v1044, %v1052
        %v1065 = vmul.f32 %v1045, %v1052
        %v1066 = vmul.f32 %v1046, %v1052
        %v1067 = vmul.f32 %v1047, %v1052
        %v1068 = vmul.f32 %v1048, %v1052
        %v1069 = vlaneseq
        %v1070 = vshrl.u32 %v1069, 7
        %v1071 = vsub.s32 5, %v1070
        %v1072 = vrot.slane %v277, %v1071
        %v1073 = vadd.f32 %v1053, %v1072
        %v1074 = vadd.f32 %v1054, %v1072
        %v1075 = vadd.f32 %v1055, %v1072
        %v1076 = vadd.f32 %v1056, %v1072
        %v1077 = vadd.f32 %v1057, %v1072
        %v1078 = vadd.f32 %v1058, %v1072
        %v1079 = vadd.f32 %v1059, %v1072
        %v1080 = vadd.f32 %v1060, %v1072
        %v1081 = vadd.f32 %v1061, %v1072
        %v1082 = vadd.f32 %v1062, %v1072
        %v1083 = vadd.f32 %v1063, %v1072
        %v1084 = vadd.f32 %v1064, %v1072
        %v1085 = vadd.f32 %v1065, %v1072
        %v1086 = vadd.f32 %v1066, %v1072
        %v1087 = vadd.f32 %v1067, %v1072
        %v1088 = vadd.f32 %v1068, %v1072
        %v1089 = vadd.f32 %v1073, %v261
        %v1090 = vadd.f32 %v1074, %v262
        %v1091 = vadd.f32 %v1075, %v263
        %v1092 = vadd.f32 %v1076, %v264
        %v1093 = vadd.f32 %v1077, %v265
        %v1094 = vadd.f32 %v1078, %v266
        %v1095 = vadd.f32 %v1079, %v267
        %v1096 = vadd.f32 %v1080, %v268
        %v1097 = vadd.f32 %v1081, %v269
        %v1098 = vadd.f32 %v1082, %v270
        %v1099 = vadd.f32 %v1083, %v271
        %v1100 = vadd.f32 %v1084, %v272
        %v1101 = vadd.f32 %v1085, %v273
        %v1102 = vadd.f32 %v1086, %v274
        %v1103 = vadd.f32 %v1087, %v275
        %v1104 = vadd.f32 %v1088, %v276
        %v1105 = vmul.f32 %v1089, 0.2
        %v1106 = vmul.f32 %v1090, 0.2
        %v1107 = vmul.f32 %v1091, 0.2
        %v1108 = vmul.f32 %v1092, 0.2
        %v1109 = vmul.f32 %v1093, 0.2
        %v1110 = vmul.f32 %v1094, 0.2
        %v1111 = vmul.f32 %v1095, 0.2
        %v1112 = vmul.f32 %v1096, 0.2
        %v1113 = vmul.f32 %v1097, 0.2
        %v1114 = vmul.f32 %v1098, 0.2
        %v1115 = vmul.f32 %v1099, 0.2
        %v1116 = vmul.f32 %v1100, 0.2
        %v1117 = vmul.f32 %v1101, 0.2
        %v1118 = vmul.f32 %v1102, 0.2
        %v1119 = vmul.f32 %v1103, 0.2
        %v1120 = vmul.f32 %v1104, 0.2
        %v1121 = vmax.f32 %v1089, %v1105
        %v1122 = vmax.f32 %v1090, %v1106
        %v1123 = vmax.f32 %v1091, %v1107
        %v1124 = vmax.f32 %v1092, %v1108
        %v1125 = vmax.f32 %v1093, %v1109
        %v1126 = vmax.f32 %v1094, %v1110
        %v1127 = vmax.f32 %v1095, %v1111
        %v1128 = vmax.f32 %v1096, %v1112
        %v1129 = vmax.f32 %v1097, %v1113
        %v1130 = vmax.f32 %v1098, %v1114
        %v1131 = vmax.f32 %v1099, %v1115
        %v1132 = vmax.f32 %v1100, %v1116
        %v1133 = vmax.f32 %v1101, %v1117
        %v1134 = vmax.f32 %v1102, %v1118
        %v1135 = vmax.f32 %v1103, %v1119
        %v1136 = vmax.f32 %v1104, %v1120
        %1137 = vst [vmem:[%s257] sm:$0xff] %v1121
        %1138 = vst [vmem:[%s257 + $0x8] sm:$0xff] %v1122
        %1139 = vst [vmem:[%s257 + $0x10] sm:$0xff] %v1123
        %1140 = vst [vmem:[%s257 + $0x18] sm:$0xff] %v1124
        %1141 = vst [vmem:[%s257 + $0x20] sm:$0xff] %v1125
        %1142 = vst [vmem:[%s257 + $0x28] sm:$0xff] %v1126
        %1143 = vst [vmem:[%s257 + $0x30] sm:$0xff] %v1127
        %1144 = vst [vmem:[%s257 + $0x38] sm:$0xff] %v1128
        %1145 = vst [vmem:[%s257 + $0x40] sm:$0xff] %v1129
        %1146 = vst [vmem:[%s257 + $0x48] sm:$0xff] %v1130
        %1147 = vst [vmem:[%s257 + $0x50] sm:$0xff] %v1131
        %1148 = vst [vmem:[%s257 + $0x58] sm:$0xff] %v1132
        %1149 = vst [vmem:[%s257 + $0x60] sm:$0xff] %v1133
        %1150 = vst [vmem:[%s257 + $0x68] sm:$0xff] %v1134
        %1151 = vst [vmem:[%s257 + $0x70] sm:$0xff] %v1135
        %1152 = vst [vmem:[%s257 + $0x78] sm:$0xff] %v1136
        %s1153 = sand.u32 %s120, 1
        %s1154 = scalar_lea.sflag [#allocation4], %s1153
        %s1155 = sand.u32 %s120, 1
        %s1156 = smul.addr %s1155, 128
        %s1157 = scalar_lea.vmem [#allocation10], %s1156
        // Predicated region
        $region53: #{residual_block.1} parent=35 // pred_check
          %p1158 = pneg %p130
        $region54: #{residual_block.1} parent=35 // pred_check_branch
          %1160 = sbr.rel (%p1158) target = $region56
        $region55: #{residual_block.1} parent=35 // pred_region
          %s1161 = smul.u32 16, %s23
          %s1163 = ssub.s32 2048, 2048
          %1164 = vsyncadd %s1154, %s1163
          %s1165 = smul.addr %s1161, 128
          %s1166 = scalar_lea.hbm %s4, %s1165
          %s1167 = sshll.u32 %s1157, 4
          %s1168 = int_to_ptr.vmem [resolvable:$true] %s1167
          %1173 = dma.vmem_to_hbm [thread:$0]  %s1168, 2048, %s1166, %s1154, 128, 128, 8
        $region56: #{residual_block.1} parent=35 // pred_fallthru
          _
      $region36: #{residual_block.1} parent=5 // pred_fallthru
        _
      %p1174 = scmp.le.s32.totalorder 2, %s18
      // Predicated region
      $region57: #{residual_block.1} parent=5 // pred_check
        %p1175 = pneg %p1174
      $region58: #{residual_block.1} parent=5 // pred_check_branch
        %1177 = sbr.rel (%p1175) target = $region60
      $region59: #{residual_block.1} parent=5 // pred_region
        %s1178 = ssub.s32 %s18, 2
        // Predicated region
        $region61: #{residual_block.1} parent=59 // pred_check
          %p1179 = pneg %p136
        $region62: #{residual_block.1} parent=59 // pred_check_branch
          %1181 = sbr.rel (%p1179) target = $region64
        $region63: #{residual_block.1} parent=59 // pred_region
          %s1182 = sand.u32 %s121, 1
          %s1183 = scalar_lea.sflag [#allocation4], %s1182
          %s1184 = sand.u32 %s121, 1
          %s1185 = smul.addr %s1184, 128
          %s1186 = scalar_lea.vmem [#allocation10], %s1185
          %1187 = dma.done %s1183, 2048
        $region64: #{residual_block.1} parent=59 // pred_fallthru
          _
      $region60: #{residual_block.1} parent=5 // pred_fallthru
        _
    $region6: #{residual_block.1} parent=1 // loop_footer
      %s22 = sadd.s32 1, %s18
    $region7: #{residual_block.1} parent=1 // loop_footer_branch
      %17 = sbr.rel target = $region3
    $region8: #{residual_block.1} parent=1 // loop_exit
      _
    %1188 = vsyncpa [#allocation3], 1
    %s1189 = scalar_lea.sflag [#allocation3], 1
    %1190 = vsyncpa %s1189, 1
    %1191 = vsyncpa [#allocation6], 1
    %1192 = vsyncpa [#allocation9], 1
    %1193 = vsyncpa [#allocation4], 1
    %s1194 = scalar_lea.sflag [#allocation4], 1
    %1195 = vsyncpa %s1194, 1

</llo_original>
